<compile_context>
chip_gen: v5e
topology: v5e:2x2
jax: 0.10.0
libtpu: 0.0.40
codegen_flags: <defaults>
</compile_context>

<pallas_src>
import jax
import jax.numpy as jnp
from jax import lax
from jax.experimental import pallas as pl
from jax.experimental.pallas import tpu as pltpu

# Model hyper-parameters (from UserAction_Net.__init__ defaults)
EMBED = 6
INP_LEN = 11
FEATURE_LEN = INP_LEN - 1            # 10
INP_DIM = INP_LEN + EMBED - 1        # 16
MID_DIM = 10
OUT_DIM = 1
USER_SIZE = 20                       # user_size global in the original script


def lstm2_kernel(add_ref, whid_ref, out_ref, state_s, c_s):
    """Skewed, fused 2-layer LSTM recurrence over one T-chunk.

    add_ref:  (TC, B, 8H)  precomputed x-projection + biases in grouped gate
                           layout [i0,i1, f0,f1, o0,o1, g0,g1]
    whid_ref: (2H, 8H)     fused hidden weight: rows 0:H multiply h0_{k-1}
                           (-> layer-0 gates via Whh0, layer-1 gates via Wih1),
                           rows H:2H multiply h1_{k-2} (-> layer-1 gates via Whh1)
    out_ref:  (TC, B, 2H)  h_new per iteration; columns H:2H hold h1_{k-1}
    scratch:  state_s/c_s (B, 2H) = [h0, h1] / [c0, c1], persists across chunks.
    """
    H = MID_DIM
    TC = add_ref.shape[0]

    # Zero initial LSTM state on the first chunk only.
    @pl.when(pl.program_id(0) == 0)
    def _init():
        state_s[...] = jnp.zeros_like(state_s)
        c_s[...] = jnp.zeros_like(c_s)

    # Hoist the (tiny) fused weight load out of the time loop.
    w = whid_ref[...]                                   # (2H, 8H)

    def step(k, carry):
        st, cc = carry                                  # [h0_{k-1}, h1_{k-2}], [c0, c1]
        # One fused matmul gives both layers' hidden-gate contributions;
        # x-projection + both biases were folded into add_ref offline.
        ga = jnp.dot(st, w, preferred_element_type=jnp.float32) + add_ref[k]
        # Two whole-tile EUP passes; slice the gate groups afterwards.
        sg = jax.nn.sigmoid(ga)
        th = jnp.tanh(ga)
        i_all = sg[:, 0:2 * H]                          # [i0_k, i1_{k-1}]
        f_all = sg[:, 2 * H:4 * H]
        o_all = sg[:, 4 * H:6 * H]
        g_all = th[:, 6 * H:8 * H]
        c_new = f_all * cc + i_all * g_all              # [c0_k, c1_{k-1}]
        h_new = o_all * jnp.tanh(c_new)                 # [h0_k, h1_{k-1}]
        out_ref[k] = h_new                              # off the serial chain
        return h_new, c_new

    unroll = TC if TC <= 16 else 8
    st, cc = lax.fori_loop(0, TC, step, (state_s[...], c_s[...]), unroll=unroll)
    # Spill the carried state to scratch only at the chunk boundary.
    state_s[...] = st
    c_s[...] = cc


def make_params(key):
    ks = jax.random.split(key, 13)

    def init(k, shape, scale=0.1):
        return jax.random.normal(k, shape, jnp.float32) * scale

    return dict(
        emb=init(ks[0], (USER_SIZE, EMBED), 0.5),
        # PyTorch LSTM parameter shapes (gate order i, f, g, o)
        w_ih0=init(ks[1], (4 * MID_DIM, INP_DIM)),
        w_hh0=init(ks[2], (4 * MID_DIM, MID_DIM)),
        b_ih0=init(ks[3], (4 * MID_DIM,)),
        b_hh0=init(ks[4], (4 * MID_DIM,)),
        w_ih1=init(ks[5], (4 * MID_DIM, MID_DIM)),
        w_hh1=init(ks[6], (4 * MID_DIM, MID_DIM)),
        b_ih1=init(ks[7], (4 * MID_DIM,)),
        b_hh1=init(ks[8], (4 * MID_DIM,)),
        # reg = Linear(mid, mid), Tanh, Linear(mid, out)
        w_r1=init(ks[9], (MID_DIM, MID_DIM)),
        b_r1=init(ks[10], (MID_DIM,)),
        w_r2=init(ks[11], (OUT_DIM, MID_DIM)),
        b_r2=init(ks[12], (OUT_DIM,)),
    )


def prepare_kernel_params(params):
    """Build the fused / gate-regrouped weights ONCE (outside the hot path).

    Grouped gate layout along the 8H axis: [i0,i1, f0,f1, o0,o1, g0,g1]
    (PyTorch per-layer order is (i, f, g, o)).
    """
    H = MID_DIM
    src_block = (0, 1, 3, 2)          # i, f, o, g -> PyTorch 4H block indices

    def scatter(dst, w4h, layer):
        # Place the 4 gate blocks of `w4h` (last dim 4H, PyTorch order) into
        # the grouped 8H layout for the given layer.
        for gidx, s in enumerate(src_block):
            lo = gidx * 2 * H + layer * H
            dst = dst.at[..., lo:lo + H].set(w4h[..., s * H:(s + 1) * H])
        return dst

    # Input projection (layer-1 columns stay zero -> those lanes carry only b1).
    w_in = scatter(jnp.zeros((INP_DIM, 8 * H), jnp.float32),
                   params["w_ih0"].T, 0)

    # Fused hidden weight (block structure + layer skew):
    #   rows 0:H  (h0_{k-1}) -> layer-0 gates via Whh0, layer-1 gates via Wih1
    #   rows H:2H (h1_{k-2}) -> layer-1 gates via Whh1
    top = scatter(jnp.zeros((H, 8 * H), jnp.float32), params["w_hh0"].T, 0)
    top = scatter(top, params["w_ih1"].T, 1)
    bot = scatter(jnp.zeros((H, 8 * H), jnp.float32), params["w_hh1"].T, 1)
    w_hid = jnp.concatenate([top, bot], axis=0)                   # (2H, 8H)

    bias = scatter(jnp.zeros((8 * H,), jnp.float32),
                   params["b_ih0"] + params["b_hh0"], 0)
    bias = scatter(bias, params["b_ih1"] + params["b_hh1"], 1)
    bias = bias.reshape(1, 8 * H)

    return dict(
        emb=params["emb"],
        w_in=w_in,                                                # (INP_DIM, 8H)
        w_hid=w_hid,                                              # (2H, 8H)
        bias=bias,                                                # (1, 8H)
        wr1=params["w_r1"].T,                                     # (H, H)
        br1=params["b_r1"].reshape(1, MID_DIM),
        wr2=params["w_r2"].T,                                     # (H, 1)
        br2=params["b_r2"].reshape(1, OUT_DIM),
    )


def useraction_forward(x, kp, *, t_chunk=None):
    """x: (T, B, INP_LEN) float32.  Returns y: (T, B, OUT_DIM) float32."""
    T, B, _ = x.shape
    H = MID_DIM

    # --- glue: embedding lookup + concat (the x.split / embedding / cat) ---
    idx = x[:, :, 0].astype(jnp.int32)                       # (T, B)
    emb = jnp.take(kp["emb"], idx, axis=0)                   # (T, B, EMBED)
    xcat = jnp.concatenate([emb, x[:, :, 1:]], axis=-1)      # (T, B, INP_DIM)

    # --- hoisted layer-0 input projection + both biases, in kernel layout ---
    add8 = (xcat.reshape(T * B, INP_DIM) @ kp["w_in"]).reshape(T, B, 8 * H)
    add8 = add8 + kp["bias"]                                 # (T, B, 8H)
    # Skewed schedule: iteration 0 also runs a dummy "layer-1 of step -1".
    # Force its input gate (i1 columns = [H, 2H)) to -1e9 so sigmoid -> 0 and
    # it yields exactly zero h1/c1, matching the zero initial state.
    add8 = add8.at[0, :, H:2 * H].set(-1e9)

    # --- t_chunk from the PADDED VMEM footprint (8-sublane / 128-lane pad,
    #     in + out blocks, double-buffered).  Target ~8 MiB of buffers. ---
    def rup(n, m):
        return -(-n // m) * m

    bytes_per_step = rup(B, 8) * (rup(8 * H, 128) + rup(2 * H, 128)) * 4 * 2
    if t_chunk is None:
        t_chunk = max(16, (8 << 20) // bytes_per_step)
    t_total = T + 1                      # +1 epilogue step for the layer skew
    t_chunk = min(t_chunk, t_total)
    n_chunks = -(-t_total // t_chunk)
    t_pad = n_chunks * t_chunk
    # Padded steps carry the bias row so the epilogue's layer-1 step still
    # sees b1; their layer-0 outputs are never used.
    pad_rows = jnp.broadcast_to(kp["bias"].reshape(1, 1, 8 * H),
                                (t_pad - T, B, 8 * H))
    add8 = jnp.concatenate([add8, pad_rows], axis=0)         # (t_pad, B, 8H)

    h_all = pl.pallas_call(
        lstm2_kernel,
        out_shape=jax.ShapeDtypeStruct((t_pad, B, 2 * H), jnp.float32),
        grid_spec=pltpu.PrefetchScalarGridSpec(
            num_scalar_prefetch=0,
            grid=(n_chunks,),
            in_specs=[
                pl.BlockSpec((t_chunk, B, 8 * H), lambda c: (c, 0, 0)),
                pl.BlockSpec((2 * H, 8 * H), lambda c: (0, 0)),
            ],
            out_specs=pl.BlockSpec((t_chunk, B, 2 * H), lambda c: (c, 0, 0)),
            scratch_shapes=[pltpu.VMEM((B, 2 * H), jnp.float32),
                            pltpu.VMEM((B, 2 * H), jnp.float32)],
        ),
        compiler_params=pltpu.CompilerParams(
            dimension_semantics=("arbitrary",),   # recurrence: sequential chunks
            vmem_limit_bytes=32 * 1024 * 1024,
        ),
    )(add8, kp["w_hid"])

    # h_all[k][:, H:2H] = h1_{k-1}  ->  h1_t = h_all[t+1, :, H:2H]
    h1seq = h_all[1:T + 1, :, H:2 * H]                       # (T, B, H)

    # --- hoisted reg head: batched Linear -> Tanh -> Linear ---
    z = jnp.tanh(h1seq.reshape(T * B, H) @ kp["wr1"] + kp["br1"])
    y = (z @ kp["wr2"] + kp["br2"]).reshape(T, B, OUT_DIM)
    return y


def useraction_reference(x, params):
    """Pure-JAX reference mirroring the PyTorch forward (zero init state)."""
    T, B, _ = x.shape
    idx = x[:, :, 0].astype(jnp.int32)
    emb = jnp.take(params["emb"], idx, axis=0)
    xcat = jnp.concatenate([emb, x[:, :, 1:]], axis=-1)

    def cell(xt, h, c, w_ih, w_hh, b_ih, b_hh):
        g = xt @ w_ih.T + h @ w_hh.T + b_ih + b_hh
        H = h.shape[-1]
        i = jax.nn.sigmoid(g[:, :H])
        f = jax.nn.sigmoid(g[:, H:2 * H])
        gg = jnp.tanh(g[:, 2 * H:3 * H])
        o = jax.nn.sigmoid(g[:, 3 * H:])
        c = f * c + i * gg
        return o * jnp.tanh(c), c

    h0 = c0 = h1 = c1 = jnp.zeros((B, MID_DIM), jnp.float32)
    ys = []
    for t in range(T):
        h0, c0 = cell(xcat[t], h0, c0, params["w_ih0"], params["w_hh0"],
                      params["b_ih0"], params["b_hh0"])
        h1, c1 = cell(h0, h1, c1, params["w_ih1"], params["w_hh1"],
                      params["b_ih1"], params["b_hh1"])
        z = jnp.tanh(h1 @ params["w_r1"].T + params["b_r1"])
        ys.append(z @ params["w_r2"].T + params["b_r2"])
    return jnp.stack(ys, axis=0)


if __name__ == "__main__":
    key = jax.random.PRNGKey(0)
    k_idx, k_feat, k_param = jax.random.split(key, 3)

    T, B = 8, 2
    idx_col = jax.random.randint(k_idx, (T, B, 1), 0, USER_SIZE).astype(jnp.float32)
    feats = jax.random.normal(k_feat, (T, B, FEATURE_LEN), jnp.float32)
    x = jnp.concatenate([idx_col, feats], axis=-1)           # (T, B, INP_LEN)

    params = make_params(k_param)
    kp = prepare_kernel_params(params)       # fold/fuse/regroup once, off hot path

    fwd = jax.jit(useraction_forward)
    y = fwd(x, kp)
    jax.block_until_ready(y)

    y_ref = useraction_reference(x, params)
    assert y.shape == (T, B, OUT_DIM)
    assert jnp.allclose(y, y_ref, atol=1e-4, rtol=1e-4), "mismatch vs reference"

    print("KERNEL_OK")
</pallas_src>

<mosaic_0001>
module attributes {stable_mosaic.version = 11 : i64} {
  func.func @lstm2_kernel(%arg0: i32, %arg1: memref<9x2x80xf32, #tpu.memory_space<vmem>>, %arg2: memref<20x80xf32, #tpu.memory_space<vmem>>, %arg3: memref<9x2x20xf32, #tpu.memory_space<vmem>>, %arg4: memref<2x20xf32, #tpu.memory_space<vmem>>, %arg5: memref<2x20xf32, #tpu.memory_space<vmem>>) attributes {dimension_semantics = [#tpu.dimension_semantics<arbitrary>], iteration_bounds = array<i64: 1>, scalar_prefetch = 0 : i64, scratch_operands = 2 : i64, tpu.core_type = #tpu.core_type<tc>, window_params = [{transform_indices = @transform_0, window_bounds = array<i64: 9, 2, 80>}, {pipeline_mode = #tpu.pipeline_mode<synchronous>, transform_indices = @transform_1, window_bounds = array<i64: 20, 80>}, {transform_indices = @transform_2, window_bounds = array<i64: 9, 2, 20>}]} {
    %c0_i32 = arith.constant 0 : i32
    %0 = arith.cmpi eq, %arg0, %c0_i32 : i32
    %1 = arith.extui %0 : i1 to i32
    %c0_i32_0 = arith.constant 0 : i32
    %2 = arith.cmpi ne, %1, %c0_i32_0 : i32
    scf.if %2 {
      %cst_64 = arith.constant 0.000000e+00 : f32
      %224 = vector.broadcast %cst_64 : f32 to vector<2x20xf32>
      %c0_65 = arith.constant 0 : index
      %c0_66 = arith.constant 0 : index
      %225 = vector.load %arg4[%c0_65, %c0_66] : memref<2x20xf32, #tpu.memory_space<vmem>>, vector<2x20xf32>
      tpu.vector_store %arg4[%c0_65, %c0_66], %224 {strides = array<i32>} : memref<2x20xf32, #tpu.memory_space<vmem>>, vector<2x20xf32>,
      %cst_67 = arith.constant 0.000000e+00 : f32
      %226 = vector.broadcast %cst_67 : f32 to vector<2x20xf32>
      %c0_68 = arith.constant 0 : index
      %c0_69 = arith.constant 0 : index
      %227 = vector.load %arg5[%c0_68, %c0_69] : memref<2x20xf32, #tpu.memory_space<vmem>>, vector<2x20xf32>
      tpu.vector_store %arg5[%c0_68, %c0_69], %226 {strides = array<i32>} : memref<2x20xf32, #tpu.memory_space<vmem>>, vector<2x20xf32>,
    } else {
    }
    %c0 = arith.constant 0 : index
    %c0_1 = arith.constant 0 : index
    %3 = vector.load %arg2[%c0, %c0_1] : memref<20x80xf32, #tpu.memory_space<vmem>>, vector<20x80xf32>
    %c0_2 = arith.constant 0 : index
    %c0_3 = arith.constant 0 : index
    %4 = vector.load %arg4[%c0_2, %c0_3] : memref<2x20xf32, #tpu.memory_space<vmem>>, vector<2x20xf32>
    %c0_4 = arith.constant 0 : index
    %c0_5 = arith.constant 0 : index
    %5 = vector.load %arg5[%c0_4, %c0_5] : memref<2x20xf32, #tpu.memory_space<vmem>>, vector<2x20xf32>
    %c0_i32_6 = arith.constant 0 : i32
    %cst = arith.constant dense<0.000000e+00> : vector<2x80xf32>
    %6 = tpu.matmul %4, %3, %cst {dimension_numbers = #tpu.dot_dimension_numbers<[1], [0], [0], [1], [0, 0, 1, 1], [], []>} : vector<2x20xf32>, vector<20x80xf32>, vector<2x80xf32> -> vector<2x80xf32>
    %7 = arith.index_cast %c0_i32_6 : i32 to index
    %c0_7 = arith.constant 0 : index
    %c0_8 = arith.constant 0 : index
    %8 = vector.load %arg1[%7, %c0_7, %c0_8] : memref<9x2x80xf32, #tpu.memory_space<vmem>>, vector<1x2x80xf32>
    %9 = vector.shape_cast %8 : vector<1x2x80xf32> to vector<2x80xf32>
    %10 = arith.addf %6, %9 : vector<2x80xf32>
    %11 = arith.negf %10 : vector<2x80xf32>
    %12 = math.exp %11 : vector<2x80xf32>
    %cst_9 = arith.constant 1.000000e+00 : f32
    %13 = vector.broadcast %cst_9 : f32 to vector<2x80xf32>
    %14 = arith.addf %13, %12 : vector<2x80xf32>
    %15 = arith.divf %13, %14 : vector<2x80xf32>
    %16 = math.tanh %10 : vector<2x80xf32>
    %17 = vector.extract_strided_slice %15 {offsets = [0, 0], sizes = [2, 20], strides = [1, 1]} : vector<2x80xf32> to vector<2x20xf32>
    %18 = vector.extract_strided_slice %15 {offsets = [0, 20], sizes = [2, 20], strides = [1, 1]} : vector<2x80xf32> to vector<2x20xf32>
    %19 = vector.extract_strided_slice %15 {offsets = [0, 40], sizes = [2, 20], strides = [1, 1]} : vector<2x80xf32> to vector<2x20xf32>
    %20 = vector.extract_strided_slice %16 {offsets = [0, 60], sizes = [2, 20], strides = [1, 1]} : vector<2x80xf32> to vector<2x20xf32>
    %21 = arith.mulf %18, %5 : vector<2x20xf32>
    %22 = arith.mulf %17, %20 : vector<2x20xf32>
    %23 = arith.addf %21, %22 : vector<2x20xf32>
    %24 = math.tanh %23 : vector<2x20xf32>
    %25 = arith.mulf %19, %24 : vector<2x20xf32>
    %26 = arith.index_cast %c0_i32_6 : i32 to index
    %c0_10 = arith.constant 0 : index
    %c0_11 = arith.constant 0 : index
    %27 = vector.load %arg3[%26, %c0_10, %c0_11] : memref<9x2x20xf32, #tpu.memory_space<vmem>>, vector<1x2x20xf32>
    %28 = vector.shape_cast %27 : vector<1x2x20xf32> to vector<2x20xf32>
    %29 = vector.shape_cast %25 : vector<2x20xf32> to vector<1x2x20xf32>
    tpu.vector_store %arg3[%26, %c0_10, %c0_11], %29 {strides = array<i32>} : memref<9x2x20xf32, #tpu.memory_space<vmem>>, vector<1x2x20xf32>,
    %c1_i32 = arith.constant 1 : i32
    %cst_12 = arith.constant dense<0.000000e+00> : vector<2x80xf32>
    %30 = tpu.matmul %25, %3, %cst_12 {dimension_numbers = #tpu.dot_dimension_numbers<[1], [0], [0], [1], [0, 0, 1, 1], [], []>} : vector<2x20xf32>, vector<20x80xf32>, vector<2x80xf32> -> vector<2x80xf32>
    %31 = arith.index_cast %c1_i32 : i32 to index
    %c0_13 = arith.constant 0 : index
    %c0_14 = arith.constant 0 : index
    %32 = vector.load %arg1[%31, %c0_13, %c0_14] : memref<9x2x80xf32, #tpu.memory_space<vmem>>, vector<1x2x80xf32>
    %33 = vector.shape_cast %32 : vector<1x2x80xf32> to vector<2x80xf32>
    %34 = arith.addf %30, %33 : vector<2x80xf32>
    %35 = arith.negf %34 : vector<2x80xf32>
    %36 = math.exp %35 : vector<2x80xf32>
    %cst_15 = arith.constant 1.000000e+00 : f32
    %37 = vector.broadcast %cst_15 : f32 to vector<2x80xf32>
    %38 = arith.addf %37, %36 : vector<2x80xf32>
    %39 = arith.divf %37, %38 : vector<2x80xf32>
    %40 = math.tanh %34 : vector<2x80xf32>
    %41 = vector.extract_strided_slice %39 {offsets = [0, 0], sizes = [2, 20], strides = [1, 1]} : vector<2x80xf32> to vector<2x20xf32>
    %42 = vector.extract_strided_slice %39 {offsets = [0, 20], sizes = [2, 20], strides = [1, 1]} : vector<2x80xf32> to vector<2x20xf32>
    %43 = vector.extract_strided_slice %39 {offsets = [0, 40], sizes = [2, 20], strides = [1, 1]} : vector<2x80xf32> to vector<2x20xf32>
    %44 = vector.extract_strided_slice %40 {offsets = [0, 60], sizes = [2, 20], strides = [1, 1]} : vector<2x80xf32> to vector<2x20xf32>
    %45 = arith.mulf %42, %23 : vector<2x20xf32>
    %46 = arith.mulf %41, %44 : vector<2x20xf32>
    %47 = arith.addf %45, %46 : vector<2x20xf32>
    %48 = math.tanh %47 : vector<2x20xf32>
    %49 = arith.mulf %43, %48 : vector<2x20xf32>
    %50 = arith.index_cast %c1_i32 : i32 to index
    %c0_16 = arith.constant 0 : index
    %c0_17 = arith.constant 0 : index
    %51 = vector.load %arg3[%50, %c0_16, %c0_17] : memref<9x2x20xf32, #tpu.memory_space<vmem>>, vector<1x2x20xf32>
    %52 = vector.shape_cast %51 : vector<1x2x20xf32> to vector<2x20xf32>
    %53 = vector.shape_cast %49 : vector<2x20xf32> to vector<1x2x20xf32>
    tpu.vector_store %arg3[%50, %c0_16, %c0_17], %53 {strides = array<i32>} : memref<9x2x20xf32, #tpu.memory_space<vmem>>, vector<1x2x20xf32>,
    %c2_i32 = arith.constant 2 : i32
    %cst_18 = arith.constant dense<0.000000e+00> : vector<2x80xf32>
    %54 = tpu.matmul %49, %3, %cst_18 {dimension_numbers = #tpu.dot_dimension_numbers<[1], [0], [0], [1], [0, 0, 1, 1], [], []>} : vector<2x20xf32>, vector<20x80xf32>, vector<2x80xf32> -> vector<2x80xf32>
    %55 = arith.index_cast %c2_i32 : i32 to index
    %c0_19 = arith.constant 0 : index
    %c0_20 = arith.constant 0 : index
    %56 = vector.load %arg1[%55, %c0_19, %c0_20] : memref<9x2x80xf32, #tpu.memory_space<vmem>>, vector<1x2x80xf32>
    %57 = vector.shape_cast %56 : vector<1x2x80xf32> to vector<2x80xf32>
    %58 = arith.addf %54, %57 : vector<2x80xf32>
    %59 = arith.negf %58 : vector<2x80xf32>
    %60 = math.exp %59 : vector<2x80xf32>
    %cst_21 = arith.constant 1.000000e+00 : f32
    %61 = vector.broadcast %cst_21 : f32 to vector<2x80xf32>
    %62 = arith.addf %61, %60 : vector<2x80xf32>
    %63 = arith.divf %61, %62 : vector<2x80xf32>
    %64 = math.tanh %58 : vector<2x80xf32>
    %65 = vector.extract_strided_slice %63 {offsets = [0, 0], sizes = [2, 20], strides = [1, 1]} : vector<2x80xf32> to vector<2x20xf32>
    %66 = vector.extract_strided_slice %63 {offsets = [0, 20], sizes = [2, 20], strides = [1, 1]} : vector<2x80xf32> to vector<2x20xf32>
    %67 = vector.extract_strided_slice %63 {offsets = [0, 40], sizes = [2, 20], strides = [1, 1]} : vector<2x80xf32> to vector<2x20xf32>
    %68 = vector.extract_strided_slice %64 {offsets = [0, 60], sizes = [2, 20], strides = [1, 1]} : vector<2x80xf32> to vector<2x20xf32>
    %69 = arith.mulf %66, %47 : vector<2x20xf32>
    %70 = arith.mulf %65, %68 : vector<2x20xf32>
    %71 = arith.addf %69, %70 : vector<2x20xf32>
    %72 = math.tanh %71 : vector<2x20xf32>
    %73 = arith.mulf %67, %72 : vector<2x20xf32>
    %74 = arith.index_cast %c2_i32 : i32 to index
    %c0_22 = arith.constant 0 : index
    %c0_23 = arith.constant 0 : index
    %75 = vector.load %arg3[%74, %c0_22, %c0_23] : memref<9x2x20xf32, #tpu.memory_space<vmem>>, vector<1x2x20xf32>
    %76 = vector.shape_cast %75 : vector<1x2x20xf32> to vector<2x20xf32>
    %77 = vector.shape_cast %73 : vector<2x20xf32> to vector<1x2x20xf32>
    tpu.vector_store %arg3[%74, %c0_22, %c0_23], %77 {strides = array<i32>} : memref<9x2x20xf32, #tpu.memory_space<vmem>>, vector<1x2x20xf32>,
    %c3_i32 = arith.constant 3 : i32
    %cst_24 = arith.constant dense<0.000000e+00> : vector<2x80xf32>
    %78 = tpu.matmul %73, %3, %cst_24 {dimension_numbers = #tpu.dot_dimension_numbers<[1], [0], [0], [1], [0, 0, 1, 1], [], []>} : vector<2x20xf32>, vector<20x80xf32>, vector<2x80xf32> -> vector<2x80xf32>
    %79 = arith.index_cast %c3_i32 : i32 to index
    %c0_25 = arith.constant 0 : index
    %c0_26 = arith.constant 0 : index
    %80 = vector.load %arg1[%79, %c0_25, %c0_26] : memref<9x2x80xf32, #tpu.memory_space<vmem>>, vector<1x2x80xf32>
    %81 = vector.shape_cast %80 : vector<1x2x80xf32> to vector<2x80xf32>
    %82 = arith.addf %78, %81 : vector<2x80xf32>
    %83 = arith.negf %82 : vector<2x80xf32>
    %84 = math.exp %83 : vector<2x80xf32>
    %cst_27 = arith.constant 1.000000e+00 : f32
    %85 = vector.broadcast %cst_27 : f32 to vector<2x80xf32>
    %86 = arith.addf %85, %84 : vector<2x80xf32>
    %87 = arith.divf %85, %86 : vector<2x80xf32>
    %88 = math.tanh %82 : vector<2x80xf32>
    %89 = vector.extract_strided_slice %87 {offsets = [0, 0], sizes = [2, 20], strides = [1, 1]} : vector<2x80xf32> to vector<2x20xf32>
    %90 = vector.extract_strided_slice %87 {offsets = [0, 20], sizes = [2, 20], strides = [1, 1]} : vector<2x80xf32> to vector<2x20xf32>
    %91 = vector.extract_strided_slice %87 {offsets = [0, 40], sizes = [2, 20], strides = [1, 1]} : vector<2x80xf32> to vector<2x20xf32>
    %92 = vector.extract_strided_slice %88 {offsets = [0, 60], sizes = [2, 20], strides = [1, 1]} : vector<2x80xf32> to vector<2x20xf32>
    %93 = arith.mulf %90, %71 : vector<2x20xf32>
    %94 = arith.mulf %89, %92 : vector<2x20xf32>
    %95 = arith.addf %93, %94 : vector<2x20xf32>
    %96 = math.tanh %95 : vector<2x20xf32>
    %97 = arith.mulf %91, %96 : vector<2x20xf32>
    %98 = arith.index_cast %c3_i32 : i32 to index
    %c0_28 = arith.constant 0 : index
    %c0_29 = arith.constant 0 : index
    %99 = vector.load %arg3[%98, %c0_28, %c0_29] : memref<9x2x20xf32, #tpu.memory_space<vmem>>, vector<1x2x20xf32>
    %100 = vector.shape_cast %99 : vector<1x2x20xf32> to vector<2x20xf32>
    %101 = vector.shape_cast %97 : vector<2x20xf32> to vector<1x2x20xf32>
    tpu.vector_store %arg3[%98, %c0_28, %c0_29], %101 {strides = array<i32>} : memref<9x2x20xf32, #tpu.memory_space<vmem>>, vector<1x2x20xf32>,
    %c4_i32 = arith.constant 4 : i32
    %cst_30 = arith.constant dense<0.000000e+00> : vector<2x80xf32>
    %102 = tpu.matmul %97, %3, %cst_30 {dimension_numbers = #tpu.dot_dimension_numbers<[1], [0], [0], [1], [0, 0, 1, 1], [], []>} : vector<2x20xf32>, vector<20x80xf32>, vector<2x80xf32> -> vector<2x80xf32>
    %103 = arith.index_cast %c4_i32 : i32 to index
    %c0_31 = arith.constant 0 : index
    %c0_32 = arith.constant 0 : index
    %104 = vector.load %arg1[%103, %c0_31, %c0_32] : memref<9x2x80xf32, #tpu.memory_space<vmem>>, vector<1x2x80xf32>
    %105 = vector.shape_cast %104 : vector<1x2x80xf32> to vector<2x80xf32>
    %106 = arith.addf %102, %105 : vector<2x80xf32>
    %107 = arith.negf %106 : vector<2x80xf32>
    %108 = math.exp %107 : vector<2x80xf32>
    %cst_33 = arith.constant 1.000000e+00 : f32
    %109 = vector.broadcast %cst_33 : f32 to vector<2x80xf32>
    %110 = arith.addf %109, %108 : vector<2x80xf32>
    %111 = arith.divf %109, %110 : vector<2x80xf32>
    %112 = math.tanh %106 : vector<2x80xf32>
    %113 = vector.extract_strided_slice %111 {offsets = [0, 0], sizes = [2, 20], strides = [1, 1]} : vector<2x80xf32> to vector<2x20xf32>
    %114 = vector.extract_strided_slice %111 {offsets = [0, 20], sizes = [2, 20], strides = [1, 1]} : vector<2x80xf32> to vector<2x20xf32>
    %115 = vector.extract_strided_slice %111 {offsets = [0, 40], sizes = [2, 20], strides = [1, 1]} : vector<2x80xf32> to vector<2x20xf32>
    %116 = vector.extract_strided_slice %112 {offsets = [0, 60], sizes = [2, 20], strides = [1, 1]} : vector<2x80xf32> to vector<2x20xf32>
    %117 = arith.mulf %114, %95 : vector<2x20xf32>
    %118 = arith.mulf %113, %116 : vector<2x20xf32>
    %119 = arith.addf %117, %118 : vector<2x20xf32>
    %120 = math.tanh %119 : vector<2x20xf32>
    %121 = arith.mulf %115, %120 : vector<2x20xf32>
    %122 = arith.index_cast %c4_i32 : i32 to index
    %c0_34 = arith.constant 0 : index
    %c0_35 = arith.constant 0 : index
    %123 = vector.load %arg3[%122, %c0_34, %c0_35] : memref<9x2x20xf32, #tpu.memory_space<vmem>>, vector<1x2x20xf32>
    %124 = vector.shape_cast %123 : vector<1x2x20xf32> to vector<2x20xf32>
    %125 = vector.shape_cast %121 : vector<2x20xf32> to vector<1x2x20xf32>
    tpu.vector_store %arg3[%122, %c0_34, %c0_35], %125 {strides = array<i32>} : memref<9x2x20xf32, #tpu.memory_space<vmem>>, vector<1x2x20xf32>,
    %c5_i32 = arith.constant 5 : i32
    %cst_36 = arith.constant dense<0.000000e+00> : vector<2x80xf32>
    %126 = tpu.matmul %121, %3, %cst_36 {dimension_numbers = #tpu.dot_dimension_numbers<[1], [0], [0], [1], [0, 0, 1, 1], [], []>} : vector<2x20xf32>, vector<20x80xf32>, vector<2x80xf32> -> vector<2x80xf32>
    %127 = arith.index_cast %c5_i32 : i32 to index
    %c0_37 = arith.constant 0 : index
    %c0_38 = arith.constant 0 : index
    %128 = vector.load %arg1[%127, %c0_37, %c0_38] : memref<9x2x80xf32, #tpu.memory_space<vmem>>, vector<1x2x80xf32>
    %129 = vector.shape_cast %128 : vector<1x2x80xf32> to vector<2x80xf32>
    %130 = arith.addf %126, %129 : vector<2x80xf32>
    %131 = arith.negf %130 : vector<2x80xf32>
    %132 = math.exp %131 : vector<2x80xf32>
    %cst_39 = arith.constant 1.000000e+00 : f32
    %133 = vector.broadcast %cst_39 : f32 to vector<2x80xf32>
    %134 = arith.addf %133, %132 : vector<2x80xf32>
    %135 = arith.divf %133, %134 : vector<2x80xf32>
    %136 = math.tanh %130 : vector<2x80xf32>
    %137 = vector.extract_strided_slice %135 {offsets = [0, 0], sizes = [2, 20], strides = [1, 1]} : vector<2x80xf32> to vector<2x20xf32>
    %138 = vector.extract_strided_slice %135 {offsets = [0, 20], sizes = [2, 20], strides = [1, 1]} : vector<2x80xf32> to vector<2x20xf32>
    %139 = vector.extract_strided_slice %135 {offsets = [0, 40], sizes = [2, 20], strides = [1, 1]} : vector<2x80xf32> to vector<2x20xf32>
    %140 = vector.extract_strided_slice %136 {offsets = [0, 60], sizes = [2, 20], strides = [1, 1]} : vector<2x80xf32> to vector<2x20xf32>
    %141 = arith.mulf %138, %119 : vector<2x20xf32>
    %142 = arith.mulf %137, %140 : vector<2x20xf32>
    %143 = arith.addf %141, %142 : vector<2x20xf32>
    %144 = math.tanh %143 : vector<2x20xf32>
    %145 = arith.mulf %139, %144 : vector<2x20xf32>
    %146 = arith.index_cast %c5_i32 : i32 to index
    %c0_40 = arith.constant 0 : index
    %c0_41 = arith.constant 0 : index
    %147 = vector.load %arg3[%146, %c0_40, %c0_41] : memref<9x2x20xf32, #tpu.memory_space<vmem>>, vector<1x2x20xf32>
    %148 = vector.shape_cast %147 : vector<1x2x20xf32> to vector<2x20xf32>
    %149 = vector.shape_cast %145 : vector<2x20xf32> to vector<1x2x20xf32>
    tpu.vector_store %arg3[%146, %c0_40, %c0_41], %149 {strides = array<i32>} : memref<9x2x20xf32, #tpu.memory_space<vmem>>, vector<1x2x20xf32>,
    %c6_i32 = arith.constant 6 : i32
    %cst_42 = arith.constant dense<0.000000e+00> : vector<2x80xf32>
    %150 = tpu.matmul %145, %3, %cst_42 {dimension_numbers = #tpu.dot_dimension_numbers<[1], [0], [0], [1], [0, 0, 1, 1], [], []>} : vector<2x20xf32>, vector<20x80xf32>, vector<2x80xf32> -> vector<2x80xf32>
    %151 = arith.index_cast %c6_i32 : i32 to index
    %c0_43 = arith.constant 0 : index
    %c0_44 = arith.constant 0 : index
    %152 = vector.load %arg1[%151, %c0_43, %c0_44] : memref<9x2x80xf32, #tpu.memory_space<vmem>>, vector<1x2x80xf32>
    %153 = vector.shape_cast %152 : vector<1x2x80xf32> to vector<2x80xf32>
    %154 = arith.addf %150, %153 : vector<2x80xf32>
    %155 = arith.negf %154 : vector<2x80xf32>
    %156 = math.exp %155 : vector<2x80xf32>
    %cst_45 = arith.constant 1.000000e+00 : f32
    %157 = vector.broadcast %cst_45 : f32 to vector<2x80xf32>
    %158 = arith.addf %157, %156 : vector<2x80xf32>
    %159 = arith.divf %157, %158 : vector<2x80xf32>
    %160 = math.tanh %154 : vector<2x80xf32>
    %161 = vector.extract_strided_slice %159 {offsets = [0, 0], sizes = [2, 20], strides = [1, 1]} : vector<2x80xf32> to vector<2x20xf32>
    %162 = vector.extract_strided_slice %159 {offsets = [0, 20], sizes = [2, 20], strides = [1, 1]} : vector<2x80xf32> to vector<2x20xf32>
    %163 = vector.extract_strided_slice %159 {offsets = [0, 40], sizes = [2, 20], strides = [1, 1]} : vector<2x80xf32> to vector<2x20xf32>
    %164 = vector.extract_strided_slice %160 {offsets = [0, 60], sizes = [2, 20], strides = [1, 1]} : vector<2x80xf32> to vector<2x20xf32>
    %165 = arith.mulf %162, %143 : vector<2x20xf32>
    %166 = arith.mulf %161, %164 : vector<2x20xf32>
    %167 = arith.addf %165, %166 : vector<2x20xf32>
    %168 = math.tanh %167 : vector<2x20xf32>
    %169 = arith.mulf %163, %168 : vector<2x20xf32>
    %170 = arith.index_cast %c6_i32 : i32 to index
    %c0_46 = arith.constant 0 : index
    %c0_47 = arith.constant 0 : index
    %171 = vector.load %arg3[%170, %c0_46, %c0_47] : memref<9x2x20xf32, #tpu.memory_space<vmem>>, vector<1x2x20xf32>
    %172 = vector.shape_cast %171 : vector<1x2x20xf32> to vector<2x20xf32>
    %173 = vector.shape_cast %169 : vector<2x20xf32> to vector<1x2x20xf32>
    tpu.vector_store %arg3[%170, %c0_46, %c0_47], %173 {strides = array<i32>} : memref<9x2x20xf32, #tpu.memory_space<vmem>>, vector<1x2x20xf32>,
    %c7_i32 = arith.constant 7 : i32
    %cst_48 = arith.constant dense<0.000000e+00> : vector<2x80xf32>
    %174 = tpu.matmul %169, %3, %cst_48 {dimension_numbers = #tpu.dot_dimension_numbers<[1], [0], [0], [1], [0, 0, 1, 1], [], []>} : vector<2x20xf32>, vector<20x80xf32>, vector<2x80xf32> -> vector<2x80xf32>
    %175 = arith.index_cast %c7_i32 : i32 to index
    %c0_49 = arith.constant 0 : index
    %c0_50 = arith.constant 0 : index
    %176 = vector.load %arg1[%175, %c0_49, %c0_50] : memref<9x2x80xf32, #tpu.memory_space<vmem>>, vector<1x2x80xf32>
    %177 = vector.shape_cast %176 : vector<1x2x80xf32> to vector<2x80xf32>
    %178 = arith.addf %174, %177 : vector<2x80xf32>
    %179 = arith.negf %178 : vector<2x80xf32>
    %180 = math.exp %179 : vector<2x80xf32>
    %cst_51 = arith.constant 1.000000e+00 : f32
    %181 = vector.broadcast %cst_51 : f32 to vector<2x80xf32>
    %182 = arith.addf %181, %180 : vector<2x80xf32>
    %183 = arith.divf %181, %182 : vector<2x80xf32>
    %184 = math.tanh %178 : vector<2x80xf32>
    %185 = vector.extract_strided_slice %183 {offsets = [0, 0], sizes = [2, 20], strides = [1, 1]} : vector<2x80xf32> to vector<2x20xf32>
    %186 = vector.extract_strided_slice %183 {offsets = [0, 20], sizes = [2, 20], strides = [1, 1]} : vector<2x80xf32> to vector<2x20xf32>
    %187 = vector.extract_strided_slice %183 {offsets = [0, 40], sizes = [2, 20], strides = [1, 1]} : vector<2x80xf32> to vector<2x20xf32>
    %188 = vector.extract_strided_slice %184 {offsets = [0, 60], sizes = [2, 20], strides = [1, 1]} : vector<2x80xf32> to vector<2x20xf32>
    %189 = arith.mulf %186, %167 : vector<2x20xf32>
    %190 = arith.mulf %185, %188 : vector<2x20xf32>
    %191 = arith.addf %189, %190 : vector<2x20xf32>
    %192 = math.tanh %191 : vector<2x20xf32>
    %193 = arith.mulf %187, %192 : vector<2x20xf32>
    %194 = arith.index_cast %c7_i32 : i32 to index
    %c0_52 = arith.constant 0 : index
    %c0_53 = arith.constant 0 : index
    %195 = vector.load %arg3[%194, %c0_52, %c0_53] : memref<9x2x20xf32, #tpu.memory_space<vmem>>, vector<1x2x20xf32>
    %196 = vector.shape_cast %195 : vector<1x2x20xf32> to vector<2x20xf32>
    %197 = vector.shape_cast %193 : vector<2x20xf32> to vector<1x2x20xf32>
    tpu.vector_store %arg3[%194, %c0_52, %c0_53], %197 {strides = array<i32>} : memref<9x2x20xf32, #tpu.memory_space<vmem>>, vector<1x2x20xf32>,
    %c8_i32 = arith.constant 8 : i32
    %cst_54 = arith.constant dense<0.000000e+00> : vector<2x80xf32>
    %198 = tpu.matmul %193, %3, %cst_54 {dimension_numbers = #tpu.dot_dimension_numbers<[1], [0], [0], [1], [0, 0, 1, 1], [], []>} : vector<2x20xf32>, vector<20x80xf32>, vector<2x80xf32> -> vector<2x80xf32>
    %199 = arith.index_cast %c8_i32 : i32 to index
    %c0_55 = arith.constant 0 : index
    %c0_56 = arith.constant 0 : index
    %200 = vector.load %arg1[%199, %c0_55, %c0_56] : memref<9x2x80xf32, #tpu.memory_space<vmem>>, vector<1x2x80xf32>
    %201 = vector.shape_cast %200 : vector<1x2x80xf32> to vector<2x80xf32>
    %202 = arith.addf %198, %201 : vector<2x80xf32>
    %203 = arith.negf %202 : vector<2x80xf32>
    %204 = math.exp %203 : vector<2x80xf32>
    %cst_57 = arith.constant 1.000000e+00 : f32
    %205 = vector.broadcast %cst_57 : f32 to vector<2x80xf32>
    %206 = arith.addf %205, %204 : vector<2x80xf32>
    %207 = arith.divf %205, %206 : vector<2x80xf32>
    %208 = math.tanh %202 : vector<2x80xf32>
    %209 = vector.extract_strided_slice %207 {offsets = [0, 0], sizes = [2, 20], strides = [1, 1]} : vector<2x80xf32> to vector<2x20xf32>
    %210 = vector.extract_strided_slice %207 {offsets = [0, 20], sizes = [2, 20], strides = [1, 1]} : vector<2x80xf32> to vector<2x20xf32>
    %211 = vector.extract_strided_slice %207 {offsets = [0, 40], sizes = [2, 20], strides = [1, 1]} : vector<2x80xf32> to vector<2x20xf32>
    %212 = vector.extract_strided_slice %208 {offsets = [0, 60], sizes = [2, 20], strides = [1, 1]} : vector<2x80xf32> to vector<2x20xf32>
    %213 = arith.mulf %210, %191 : vector<2x20xf32>
    %214 = arith.mulf %209, %212 : vector<2x20xf32>
    %215 = arith.addf %213, %214 : vector<2x20xf32>
    %216 = math.tanh %215 : vector<2x20xf32>
    %217 = arith.mulf %211, %216 : vector<2x20xf32>
    %218 = arith.index_cast %c8_i32 : i32 to index
    %c0_58 = arith.constant 0 : index
    %c0_59 = arith.constant 0 : index
    %219 = vector.load %arg3[%218, %c0_58, %c0_59] : memref<9x2x20xf32, #tpu.memory_space<vmem>>, vector<1x2x20xf32>
    %220 = vector.shape_cast %219 : vector<1x2x20xf32> to vector<2x20xf32>
    %221 = vector.shape_cast %217 : vector<2x20xf32> to vector<1x2x20xf32>
    tpu.vector_store %arg3[%218, %c0_58, %c0_59], %221 {strides = array<i32>} : memref<9x2x20xf32, #tpu.memory_space<vmem>>, vector<1x2x20xf32>,
    %c9_i32 = arith.constant 9 : i32
    %c0_60 = arith.constant 0 : index
    %c0_61 = arith.constant 0 : index
    %222 = vector.load %arg4[%c0_60, %c0_61] : memref<2x20xf32, #tpu.memory_space<vmem>>, vector<2x20xf32>
    tpu.vector_store %arg4[%c0_60, %c0_61], %217 {strides = array<i32>} : memref<2x20xf32, #tpu.memory_space<vmem>>, vector<2x20xf32>,
    %c0_62 = arith.constant 0 : index
    %c0_63 = arith.constant 0 : index
    %223 = vector.load %arg5[%c0_62, %c0_63] : memref<2x20xf32, #tpu.memory_space<vmem>>, vector<2x20xf32>
    tpu.vector_store %arg5[%c0_62, %c0_63], %215 {strides = array<i32>} : memref<2x20xf32, #tpu.memory_space<vmem>>, vector<2x20xf32>,
    return
  }
  func.func @transform_0(%arg0: i32) -> (i32, i32, i32) {
    %c0_i32 = arith.constant 0 : i32
    %c0_i32_0 = arith.constant 0 : i32
    %c0_i32_1 = arith.constant 0 : i32
    return %arg0, %c0_i32, %c0_i32_0 : i32, i32, i32
  }
  func.func @transform_1(%arg0: i32) -> (i32, i32) {
    %c0_i32 = arith.constant 0 : i32
    %c0_i32_0 = arith.constant 0 : i32
    %c0_i32_1 = arith.constant 0 : i32
    return %c0_i32, %c0_i32_0 : i32, i32
  }
  func.func @transform_2(%arg0: i32) -> (i32, i32, i32) {
    %c0_i32 = arith.constant 0 : i32
    %c0_i32_0 = arith.constant 0 : i32
    %c0_i32_1 = arith.constant 0 : i32
    return %arg0, %c0_i32, %c0_i32_0 : i32, i32, i32
  }
}

</mosaic_0001>

<llo_original>
// kernel: useraction_forward.1
$region0: #{useraction_forward.1}
  #allocation0 [shape = 'u32[]', space=smem, size = 0x4, offset = 0x4, fixed_abs, tag = 'smem constant byte address 0x4 - core index']
  #allocation1 [shape = 'u32[72,128]{1,0:T(1,128)}', space=vmem, size = 0x9000, scoped, tag = 'internal scratch']
  #allocation2 [shape = 'f32[2,20]{1,0:T(2,128)}', space=vmem, size = 0x400, scoped, tag = 'scratch operand']
  #allocation3 [shape = 'f32[2,20]{1,0:T(2,128)}', space=vmem, size = 0x400, scoped, tag = 'scratch operand']
  %s0 = inlined_call_operand.vmem [shape: f32[9,2,80], index: 0, kind: input, shape index: {}]
  %s1 = inlined_call_operand.vmem [shape: f32[20,80], index: 1, kind: input, shape index: {}]
  %s2 = inlined_call_operand.vmem [shape: f32[9,2,20], index: 2, kind: output, shape index: {}]
  %s3 = sld [smem:[#allocation0]]
  $region22: #{useraction_forward.1} parent=0
    _
  %s5 = ssub.s32 1, %s3
  %s6 = scalar_select 0, %s5, %s3
  // Predicated region
  $region2: #{useraction_forward.1} parent=0 // pred_check
    _
  $region3: #{useraction_forward.1} parent=0 // pred_check_branch
    %8 = sbr.rel (0) target = $region5
  $region4: #{useraction_forward.1} parent=0 // pred_region
    _
  $region5: #{useraction_forward.1} parent=0 // pred_fallthru
    _
  // Predicated region
  $region6: #{useraction_forward.1} parent=0 // pred_check
    _
  $region7: #{useraction_forward.1} parent=0 // pred_check_branch
    %10 = sbr.rel (0) target = $region9
  $region8: #{useraction_forward.1} parent=0 // pred_region
    _
  $region9: #{useraction_forward.1} parent=0 // pred_fallthru
    _
  %p11 = scmp.eq.s32.totalorder 0, 0
  // Predicated region
  $region10: #{useraction_forward.1} parent=0 // pred_check
    %p12 = pneg %p11
  $region11: #{useraction_forward.1} parent=0 // pred_check_branch
    %14 = sbr.rel (%p12) target = $region13
  $region12: #{useraction_forward.1} parent=0 // pred_region
    %vm15 = vcmask 156672
    %16 = vst.msk [vmem:[#allocation2] sm:$0x3] %vm15, 0.0
    %17 = vst.msk [vmem:[#allocation3] sm:$0x3] %vm15, 0.0
  $region13: #{useraction_forward.1} parent=0 // pred_fallthru
    _
  %v18 = vld [vmem:[%s1] sm:$0xff]
  %v19 = vld [vmem:[%s1 + $0x8] sm:$0xff]
  %v20 = vld [vmem:[%s1 + $0x10] sm:$0xf]
  %v21 = vld [vmem:[#allocation2] sm:$0x3]
  %v22 = vld [vmem:[#allocation3] sm:$0x3]
  %v23 = vld [vmem:[%s0] sm:$0x3]
  %vm24 = vcmask 162816
  %v26 = vsel %vm24, %v21, 0
  %vm28 = vcmask 1043456
  %v30 = vsel %vm28, %v20, 0
  %32 = vmatpush.msra.mxu0 0.0
  %33 = vmatpush.msra.mxu0 0.0
  %34 = vmatpush.msra.mxu0 0.0
  %35 = vmatpush.msra.mxu0 0.0
  %36 = vmatpush.msra.mxu0 0.0
  %37 = vmatpush.msra.mxu0 0.0
  %38 = vmatpush.msra.mxu0 0.0
  %39 = vmatpush.msra.mxu0 0.0
  %40 = vmatpush.msra.mxu0 0.0
  %41 = vmatpush.msra.mxu0 0.0
  %42 = vmatpush.msra.mxu0 0.0
  %43 = vmatpush.msra.mxu0 0.0
  %44 = vmatpush.msra.mxu0 0.0
  %45 = vmatpush.msra.mxu0 %v30
  %46 = vmatpush.msra.mxu0 %v19
  %47 = vmatpush.msra.mxu0 %v18
  %48 = vmatmul.f32.gmra.mxu0 %v26
  %v49 = vpop.f32.mrf.mxu0
  %v50 = vadd.f32 %v23, %v49
  %51 = vdwg.mxu0
  %v52 = vxor.u32 %v50, 2147483648
  %v53 = vmul.f32 %v52, 1.442695
  %v54 = vpow.pop %v53
  %v55 = vadd.f32 %v54, 1.0
  %v56 = vrcp.pop %v55
  %v57 = vmul.f32 %v55, %v56
  %v58 = vsub.f32 1.0, %v57
  %v59 = vmul.f32 %v56, %v58
  %v60 = vadd.f32 %v56, %v59
  %vm61 = vweird.f32 %v55
  %vm62 = vweird.f32 %v56
  %vm63 = vmor %vm61, %vm62
  %v64 = vsel %vm63, %v56, %v60
  %v65 = vand.u32 2147483647, %v55
  %vm66 = vcmp.eq.f32.partialorder %v65, 8.507059e+37
  %v67 = vand.u32 %v55, 2147483648
  %v68 = vor.u32 1.1754944e-38, %v67
  %v69 = vsel %vm66, %v68, %v64
  %v70 = vmul.f32 1.0, %v69
  %v71 = vtanh.pop %v50
  %73 = vrot.lane.b32.xlu0 %v22, 20
  %v74 = vpop.permute.xlu0 %73
  %v76 = vmul.f32 %v70, %v74
  %78 = vrot.lane.b32.xlu0 %v71, 68
  %v79 = vpop.permute.xlu0 %78
  %v81 = vmul.f32 %v70, %v79
  %83 = vrot.lane.b32.xlu0 %v81, 20
  %v84 = vpop.permute.xlu0 %83
  %v86 = vadd.f32 %v76, %v84
  %v87 = vtanh.pop %v86
  %89 = vrot.lane.b32.xlu0 %v87, 20
  %v90 = vpop.permute.xlu0 %89
  %v92 = vmul.f32 %v70, %v90
  %94 = vrot.lane.b32.xlu0 %v92, 88
  %v95 = vpop.permute.xlu0 %94
  %vm97 = vcmask 156672
  %98 = vst.msk [vmem:[%s2] sm:$0x3] %vm97, %v95
  %s99 = scalar_lea.vmem %s0, 2
  %v100 = vld [vmem:[%s99] sm:$0x3]
  %v101 = vsel %vm24, %v95, 0
  %103 = vmatpush.msra.mxu0 0.0
  %104 = vmatpush.msra.mxu0 0.0
  %105 = vmatpush.msra.mxu0 0.0
  %106 = vmatpush.msra.mxu0 0.0
  %107 = vmatpush.msra.mxu0 0.0
  %108 = vmatpush.msra.mxu0 0.0
  %109 = vmatpush.msra.mxu0 0.0
  %110 = vmatpush.msra.mxu0 0.0
  %111 = vmatpush.msra.mxu0 0.0
  %112 = vmatpush.msra.mxu0 0.0
  %113 = vmatpush.msra.mxu0 0.0
  %114 = vmatpush.msra.mxu0 0.0
  %115 = vmatpush.msra.mxu0 0.0
  %116 = vmatpush.msra.mxu0 %v30
  %117 = vmatpush.msra.mxu0 %v19
  %118 = vmatpush.msra.mxu0 %v18
  %119 = vmatmul.f32.gmra.mxu0 %v101
  %v120 = vpop.f32.mrf.mxu0
  %v121 = vadd.f32 %v100, %v120
  %122 = vdwg.mxu0
  %v123 = vxor.u32 %v121, 2147483648
  %v124 = vmul.f32 %v123, 1.442695
  %v125 = vpow.pop %v124
  %v126 = vadd.f32 %v125, 1.0
  %v127 = vrcp.pop %v126
  %v128 = vmul.f32 %v126, %v127
  %v129 = vsub.f32 1.0, %v128
  %v130 = vmul.f32 %v127, %v129
  %v131 = vadd.f32 %v127, %v130
  %vm132 = vweird.f32 %v126
  %vm133 = vweird.f32 %v127
  %vm134 = vmor %vm132, %vm133
  %v135 = vsel %vm134, %v127, %v131
  %v136 = vand.u32 2147483647, %v126
  %vm137 = vcmp.eq.f32.partialorder %v136, 8.507059e+37
  %v138 = vand.u32 %v126, 2147483648
  %v139 = vor.u32 1.1754944e-38, %v138
  %v140 = vsel %vm137, %v139, %v135
  %v141 = vmul.f32 1.0, %v140
  %v142 = vtanh.pop %v121
  %v143 = vmul.f32 %v141, %v86
  %145 = vrot.lane.b32.xlu0 %v142, 68
  %v146 = vpop.permute.xlu0 %145
  %v148 = vmul.f32 %v141, %v146
  %150 = vrot.lane.b32.xlu0 %v148, 20
  %v151 = vpop.permute.xlu0 %150
  %v153 = vadd.f32 %v143, %v151
  %v154 = vtanh.pop %v153
  %156 = vrot.lane.b32.xlu0 %v154, 20
  %v157 = vpop.permute.xlu0 %156
  %v159 = vmul.f32 %v141, %v157
  %161 = vrot.lane.b32.xlu0 %v159, 88
  %v162 = vpop.permute.xlu0 %161
  %s164 = scalar_lea.vmem %s2, 2
  %165 = vst.msk [vmem:[%s164] sm:$0x3] %vm97, %v162
  %s166 = scalar_lea.vmem %s0, 4
  %v167 = vld [vmem:[%s166] sm:$0x3]
  %v168 = vsel %vm24, %v162, 0
  %170 = vmatpush.msra.mxu0 0.0
  %171 = vmatpush.msra.mxu0 0.0
  %172 = vmatpush.msra.mxu0 0.0
  %173 = vmatpush.msra.mxu0 0.0
  %174 = vmatpush.msra.mxu0 0.0
  %175 = vmatpush.msra.mxu0 0.0
  %176 = vmatpush.msra.mxu0 0.0
  %177 = vmatpush.msra.mxu0 0.0
  %178 = vmatpush.msra.mxu0 0.0
  %179 = vmatpush.msra.mxu0 0.0
  %180 = vmatpush.msra.mxu0 0.0
  %181 = vmatpush.msra.mxu0 0.0
  %182 = vmatpush.msra.mxu0 0.0
  %183 = vmatpush.msra.mxu0 %v30
  %184 = vmatpush.msra.mxu0 %v19
  %185 = vmatpush.msra.mxu0 %v18
  %186 = vmatmul.f32.gmra.mxu0 %v168
  %v187 = vpop.f32.mrf.mxu0
  %v188 = vadd.f32 %v167, %v187
  %189 = vdwg.mxu0
  %v190 = vxor.u32 %v188, 2147483648
  %v191 = vmul.f32 %v190, 1.442695
  %v192 = vpow.pop %v191
  %v193 = vadd.f32 %v192, 1.0
  %v194 = vrcp.pop %v193
  %v195 = vmul.f32 %v193, %v194
  %v196 = vsub.f32 1.0, %v195
  %v197 = vmul.f32 %v194, %v196
  %v198 = vadd.f32 %v194, %v197
  %vm199 = vweird.f32 %v193
  %vm200 = vweird.f32 %v194
  %vm201 = vmor %vm199, %vm200
  %v202 = vsel %vm201, %v194, %v198
  %v203 = vand.u32 2147483647, %v193
  %vm204 = vcmp.eq.f32.partialorder %v203, 8.507059e+37
  %v205 = vand.u32 %v193, 2147483648
  %v206 = vor.u32 1.1754944e-38, %v205
  %v207 = vsel %vm204, %v206, %v202
  %v208 = vmul.f32 1.0, %v207
  %v209 = vtanh.pop %v188
  %v210 = vmul.f32 %v208, %v153
  %212 = vrot.lane.b32.xlu0 %v209, 68
  %v213 = vpop.permute.xlu0 %212
  %v215 = vmul.f32 %v208, %v213
  %217 = vrot.lane.b32.xlu0 %v215, 20
  %v218 = vpop.permute.xlu0 %217
  %v220 = vadd.f32 %v210, %v218
  %v221 = vtanh.pop %v220
  %223 = vrot.lane.b32.xlu0 %v221, 20
  %v224 = vpop.permute.xlu0 %223
  %v226 = vmul.f32 %v208, %v224
  %228 = vrot.lane.b32.xlu0 %v226, 88
  %v229 = vpop.permute.xlu0 %228
  %s231 = scalar_lea.vmem %s2, 4
  %232 = vst.msk [vmem:[%s231] sm:$0x3] %vm97, %v229
  %s233 = scalar_lea.vmem %s0, 6
  %v234 = vld [vmem:[%s233] sm:$0x3]
  %v235 = vsel %vm24, %v229, 0
  %237 = vmatpush.msra.mxu0 0.0
  %238 = vmatpush.msra.mxu0 0.0
  %239 = vmatpush.msra.mxu0 0.0
  %240 = vmatpush.msra.mxu0 0.0
  %241 = vmatpush.msra.mxu0 0.0
  %242 = vmatpush.msra.mxu0 0.0
  %243 = vmatpush.msra.mxu0 0.0
  %244 = vmatpush.msra.mxu0 0.0
  %245 = vmatpush.msra.mxu0 0.0
  %246 = vmatpush.msra.mxu0 0.0
  %247 = vmatpush.msra.mxu0 0.0
  %248 = vmatpush.msra.mxu0 0.0
  %249 = vmatpush.msra.mxu0 0.0
  %250 = vmatpush.msra.mxu0 %v30
  %251 = vmatpush.msra.mxu0 %v19
  %252 = vmatpush.msra.mxu0 %v18
  %253 = vmatmul.f32.gmra.mxu0 %v235
  %v254 = vpop.f32.mrf.mxu0
  %v255 = vadd.f32 %v234, %v254
  %256 = vdwg.mxu0
  %v257 = vxor.u32 %v255, 2147483648
  %v258 = vmul.f32 %v257, 1.442695
  %v259 = vpow.pop %v258
  %v260 = vadd.f32 %v259, 1.0
  %v261 = vrcp.pop %v260
  %v262 = vmul.f32 %v260, %v261
  %v263 = vsub.f32 1.0, %v262
  %v264 = vmul.f32 %v261, %v263
  %v265 = vadd.f32 %v261, %v264
  %vm266 = vweird.f32 %v260
  %vm267 = vweird.f32 %v261
  %vm268 = vmor %vm266, %vm267
  %v269 = vsel %vm268, %v261, %v265
  %v270 = vand.u32 2147483647, %v260
  %vm271 = vcmp.eq.f32.partialorder %v270, 8.507059e+37
  %v272 = vand.u32 %v260, 2147483648
  %v273 = vor.u32 1.1754944e-38, %v272
  %v274 = vsel %vm271, %v273, %v269
  %v275 = vmul.f32 1.0, %v274
  %v276 = vtanh.pop %v255
  %v277 = vmul.f32 %v275, %v220
  %279 = vrot.lane.b32.xlu0 %v276, 68
  %v280 = vpop.permute.xlu0 %279
  %v282 = vmul.f32 %v275, %v280
  %284 = vrot.lane.b32.xlu0 %v282, 20
  %v285 = vpop.permute.xlu0 %284
  %v287 = vadd.f32 %v277, %v285
  %v288 = vtanh.pop %v287
  %290 = vrot.lane.b32.xlu0 %v288, 20
  %v291 = vpop.permute.xlu0 %290
  %v293 = vmul.f32 %v275, %v291
  %295 = vrot.lane.b32.xlu0 %v293, 88
  %v296 = vpop.permute.xlu0 %295
  %s298 = scalar_lea.vmem %s2, 6
  %299 = vst.msk [vmem:[%s298] sm:$0x3] %vm97, %v296
  %s300 = scalar_lea.vmem %s0, 8
  %v301 = vld [vmem:[%s300] sm:$0x3]
  %v302 = vsel %vm24, %v296, 0
  %304 = vmatpush.msra.mxu0 0.0
  %305 = vmatpush.msra.mxu0 0.0
  %306 = vmatpush.msra.mxu0 0.0
  %307 = vmatpush.msra.mxu0 0.0
  %308 = vmatpush.msra.mxu0 0.0
  %309 = vmatpush.msra.mxu0 0.0
  %310 = vmatpush.msra.mxu0 0.0
  %311 = vmatpush.msra.mxu0 0.0
  %312 = vmatpush.msra.mxu0 0.0
  %313 = vmatpush.msra.mxu0 0.0
  %314 = vmatpush.msra.mxu0 0.0
  %315 = vmatpush.msra.mxu0 0.0
  %316 = vmatpush.msra.mxu0 0.0
  %317 = vmatpush.msra.mxu0 %v30
  %318 = vmatpush.msra.mxu0 %v19
  %319 = vmatpush.msra.mxu0 %v18
  %320 = vmatmul.f32.gmra.mxu0 %v302
  %v321 = vpop.f32.mrf.mxu0
  %v322 = vadd.f32 %v301, %v321
  %323 = vdwg.mxu0
  %v324 = vxor.u32 %v322, 2147483648
  %v325 = vmul.f32 %v324, 1.442695
  %v326 = vpow.pop %v325
  %v327 = vadd.f32 %v326, 1.0
  %v328 = vrcp.pop %v327
  %v329 = vmul.f32 %v327, %v328
  %v330 = vsub.f32 1.0, %v329
  %v331 = vmul.f32 %v328, %v330
  %v332 = vadd.f32 %v328, %v331
  %vm333 = vweird.f32 %v327
  %vm334 = vweird.f32 %v328
  %vm335 = vmor %vm333, %vm334
  %v336 = vsel %vm335, %v328, %v332
  %v337 = vand.u32 2147483647, %v327
  %vm338 = vcmp.eq.f32.partialorder %v337, 8.507059e+37
  %v339 = vand.u32 %v327, 2147483648
  %v340 = vor.u32 1.1754944e-38, %v339
  %v341 = vsel %vm338, %v340, %v336
  %v342 = vmul.f32 1.0, %v341
  %v343 = vtanh.pop %v322
  %v344 = vmul.f32 %v342, %v287
  %346 = vrot.lane.b32.xlu0 %v343, 68
  %v347 = vpop.permute.xlu0 %346
  %v349 = vmul.f32 %v342, %v347
  %351 = vrot.lane.b32.xlu0 %v349, 20
  %v352 = vpop.permute.xlu0 %351
  %v354 = vadd.f32 %v344, %v352
  %v355 = vtanh.pop %v354
  %357 = vrot.lane.b32.xlu0 %v355, 20
  %v358 = vpop.permute.xlu0 %357
  %v360 = vmul.f32 %v342, %v358
  %362 = vrot.lane.b32.xlu0 %v360, 88
  %v363 = vpop.permute.xlu0 %362
  %s365 = scalar_lea.vmem %s2, 8
  %366 = vst.msk [vmem:[%s365] sm:$0x3] %vm97, %v363
  %s367 = scalar_lea.vmem %s0, 10
  %v368 = vld [vmem:[%s367] sm:$0x3]
  %v369 = vsel %vm24, %v363, 0
  %371 = vmatpush.msra.mxu0 0.0
  %372 = vmatpush.msra.mxu0 0.0
  %373 = vmatpush.msra.mxu0 0.0
  %374 = vmatpush.msra.mxu0 0.0
  %375 = vmatpush.msra.mxu0 0.0
  %376 = vmatpush.msra.mxu0 0.0
  %377 = vmatpush.msra.mxu0 0.0
  %378 = vmatpush.msra.mxu0 0.0
  %379 = vmatpush.msra.mxu0 0.0
  %380 = vmatpush.msra.mxu0 0.0
  %381 = vmatpush.msra.mxu0 0.0
  %382 = vmatpush.msra.mxu0 0.0
  %383 = vmatpush.msra.mxu0 0.0
  %384 = vmatpush.msra.mxu0 %v30
  %385 = vmatpush.msra.mxu0 %v19
  %386 = vmatpush.msra.mxu0 %v18
  %387 = vmatmul.f32.gmra.mxu0 %v369
  %v388 = vpop.f32.mrf.mxu0
  %v389 = vadd.f32 %v368, %v388
  %390 = vdwg.mxu0
  %v391 = vxor.u32 %v389, 2147483648
  %v392 = vmul.f32 %v391, 1.442695
  %v393 = vpow.pop %v392
  %v394 = vadd.f32 %v393, 1.0
  %v395 = vrcp.pop %v394
  %v396 = vmul.f32 %v394, %v395
  %v397 = vsub.f32 1.0, %v396
  %v398 = vmul.f32 %v395, %v397
  %v399 = vadd.f32 %v395, %v398
  %vm400 = vweird.f32 %v394
  %vm401 = vweird.f32 %v395
  %vm402 = vmor %vm400, %vm401
  %v403 = vsel %vm402, %v395, %v399
  %v404 = vand.u32 2147483647, %v394
  %vm405 = vcmp.eq.f32.partialorder %v404, 8.507059e+37
  %v406 = vand.u32 %v394, 2147483648
  %v407 = vor.u32 1.1754944e-38, %v406
  %v408 = vsel %vm405, %v407, %v403
  %v409 = vmul.f32 1.0, %v408
  %v410 = vtanh.pop %v389
  %v411 = vmul.f32 %v409, %v354
  %413 = vrot.lane.b32.xlu0 %v410, 68
  %v414 = vpop.permute.xlu0 %413
  %v416 = vmul.f32 %v409, %v414
  %418 = vrot.lane.b32.xlu0 %v416, 20
  %v419 = vpop.permute.xlu0 %418
  %v421 = vadd.f32 %v411, %v419
  %v422 = vtanh.pop %v421
  %424 = vrot.lane.b32.xlu0 %v422, 20
  %v425 = vpop.permute.xlu0 %424
  %v427 = vmul.f32 %v409, %v425
  %429 = vrot.lane.b32.xlu0 %v427, 88
  %v430 = vpop.permute.xlu0 %429
  %s432 = scalar_lea.vmem %s2, 10
  %433 = vst.msk [vmem:[%s432] sm:$0x3] %vm97, %v430
  %s434 = scalar_lea.vmem %s0, 12
  %v435 = vld [vmem:[%s434] sm:$0x3]
  %v436 = vsel %vm24, %v430, 0
  %438 = vmatpush.msra.mxu0 0.0
  %439 = vmatpush.msra.mxu0 0.0
  %440 = vmatpush.msra.mxu0 0.0
  %441 = vmatpush.msra.mxu0 0.0
  %442 = vmatpush.msra.mxu0 0.0
  %443 = vmatpush.msra.mxu0 0.0
  %444 = vmatpush.msra.mxu0 0.0
  %445 = vmatpush.msra.mxu0 0.0
  %446 = vmatpush.msra.mxu0 0.0
  %447 = vmatpush.msra.mxu0 0.0
  %448 = vmatpush.msra.mxu0 0.0
  %449 = vmatpush.msra.mxu0 0.0
  %450 = vmatpush.msra.mxu0 0.0
  %451 = vmatpush.msra.mxu0 %v30
  %452 = vmatpush.msra.mxu0 %v19
  %453 = vmatpush.msra.mxu0 %v18
  %454 = vmatmul.f32.gmra.mxu0 %v436
  %v455 = vpop.f32.mrf.mxu0
  %v456 = vadd.f32 %v435, %v455
  %457 = vdwg.mxu0
  %v458 = vxor.u32 %v456, 2147483648
  %v459 = vmul.f32 %v458, 1.442695
  %v460 = vpow.pop %v459
  %v461 = vadd.f32 %v460, 1.0
  %v462 = vrcp.pop %v461
  %v463 = vmul.f32 %v461, %v462
  %v464 = vsub.f32 1.0, %v463
  %v465 = vmul.f32 %v462, %v464
  %v466 = vadd.f32 %v462, %v465
  %vm467 = vweird.f32 %v461
  %vm468 = vweird.f32 %v462
  %vm469 = vmor %vm467, %vm468
  %v470 = vsel %vm469, %v462, %v466
  %v471 = vand.u32 2147483647, %v461
  %vm472 = vcmp.eq.f32.partialorder %v471, 8.507059e+37
  %v473 = vand.u32 %v461, 2147483648
  %v474 = vor.u32 1.1754944e-38, %v473
  %v475 = vsel %vm472, %v474, %v470
  %v476 = vmul.f32 1.0, %v475
  %v477 = vtanh.pop %v456
  %v478 = vmul.f32 %v476, %v421
  %480 = vrot.lane.b32.xlu0 %v477, 68
  %v481 = vpop.permute.xlu0 %480
  %v483 = vmul.f32 %v476, %v481
  %485 = vrot.lane.b32.xlu0 %v483, 20
  %v486 = vpop.permute.xlu0 %485
  %v488 = vadd.f32 %v478, %v486
  %v489 = vtanh.pop %v488
  %491 = vrot.lane.b32.xlu0 %v489, 20
  %v492 = vpop.permute.xlu0 %491
  %v494 = vmul.f32 %v476, %v492
  %496 = vrot.lane.b32.xlu0 %v494, 88
  %v497 = vpop.permute.xlu0 %496
  %s499 = scalar_lea.vmem %s2, 12
  %500 = vst.msk [vmem:[%s499] sm:$0x3] %vm97, %v497
  %s501 = scalar_lea.vmem %s0, 14
  %v502 = vld [vmem:[%s501] sm:$0x3]
  %v503 = vsel %vm24, %v497, 0
  %505 = vmatpush.msra.mxu0 0.0
  %506 = vmatpush.msra.mxu0 0.0
  %507 = vmatpush.msra.mxu0 0.0
  %508 = vmatpush.msra.mxu0 0.0
  %509 = vmatpush.msra.mxu0 0.0
  %510 = vmatpush.msra.mxu0 0.0
  %511 = vmatpush.msra.mxu0 0.0
  %512 = vmatpush.msra.mxu0 0.0
  %513 = vmatpush.msra.mxu0 0.0
  %514 = vmatpush.msra.mxu0 0.0
  %515 = vmatpush.msra.mxu0 0.0
  %516 = vmatpush.msra.mxu0 0.0
  %517 = vmatpush.msra.mxu0 0.0
  %518 = vmatpush.msra.mxu0 %v30
  %519 = vmatpush.msra.mxu0 %v19
  %520 = vmatpush.msra.mxu0 %v18
  %521 = vmatmul.f32.gmra.mxu0 %v503
  %v522 = vpop.f32.mrf.mxu0
  %v523 = vadd.f32 %v502, %v522
  %524 = vdwg.mxu0
  %v525 = vxor.u32 %v523, 2147483648
  %v526 = vmul.f32 %v525, 1.442695
  %v527 = vpow.pop %v526
  %v528 = vadd.f32 %v527, 1.0
  %v529 = vrcp.pop %v528
  %v530 = vmul.f32 %v528, %v529
  %v531 = vsub.f32 1.0, %v530
  %v532 = vmul.f32 %v529, %v531
  %v533 = vadd.f32 %v529, %v532
  %vm534 = vweird.f32 %v528
  %vm535 = vweird.f32 %v529
  %vm536 = vmor %vm534, %vm535
  %v537 = vsel %vm536, %v529, %v533
  %v538 = vand.u32 2147483647, %v528
  %vm539 = vcmp.eq.f32.partialorder %v538, 8.507059e+37
  %v540 = vand.u32 %v528, 2147483648
  %v541 = vor.u32 1.1754944e-38, %v540
  %v542 = vsel %vm539, %v541, %v537
  %v543 = vmul.f32 1.0, %v542
  %v544 = vtanh.pop %v523
  %v545 = vmul.f32 %v543, %v488
  %547 = vrot.lane.b32.xlu0 %v544, 68
  %v548 = vpop.permute.xlu0 %547
  %v550 = vmul.f32 %v543, %v548
  %552 = vrot.lane.b32.xlu0 %v550, 20
  %v553 = vpop.permute.xlu0 %552
  %v555 = vadd.f32 %v545, %v553
  %v556 = vtanh.pop %v555
  %558 = vrot.lane.b32.xlu0 %v556, 20
  %v559 = vpop.permute.xlu0 %558
  %v561 = vmul.f32 %v543, %v559
  %563 = vrot.lane.b32.xlu0 %v561, 88
  %v564 = vpop.permute.xlu0 %563
  %s566 = scalar_lea.vmem %s2, 14
  %567 = vst.msk [vmem:[%s566] sm:$0x3] %vm97, %v564
  %s568 = scalar_lea.vmem %s0, 16
  %v569 = vld [vmem:[%s568] sm:$0x3]
  %v570 = vsel %vm24, %v564, 0
  %572 = vmatpush.msra.mxu0 0.0
  %573 = vmatpush.msra.mxu0 0.0
  %574 = vmatpush.msra.mxu0 0.0
  %575 = vmatpush.msra.mxu0 0.0
  %576 = vmatpush.msra.mxu0 0.0
  %577 = vmatpush.msra.mxu0 0.0
  %578 = vmatpush.msra.mxu0 0.0
  %579 = vmatpush.msra.mxu0 0.0
  %580 = vmatpush.msra.mxu0 0.0
  %581 = vmatpush.msra.mxu0 0.0
  %582 = vmatpush.msra.mxu0 0.0
  %583 = vmatpush.msra.mxu0 0.0
  %584 = vmatpush.msra.mxu0 0.0
  %585 = vmatpush.msra.mxu0 %v30
  %586 = vmatpush.msra.mxu0 %v19
  %587 = vmatpush.msra.mxu0 %v18
  %588 = vmatmul.f32.gmra.mxu0 %v570
  %v589 = vpop.f32.mrf.mxu0
  %v590 = vadd.f32 %v569, %v589
  %591 = vdwg.mxu0
  %v592 = vxor.u32 %v590, 2147483648
  %v593 = vmul.f32 %v592, 1.442695
  %v594 = vpow.pop %v593
  %v595 = vadd.f32 %v594, 1.0
  %v596 = vrcp.pop %v595
  %v597 = vmul.f32 %v595, %v596
  %v598 = vsub.f32 1.0, %v597
  %v599 = vmul.f32 %v596, %v598
  %v600 = vadd.f32 %v596, %v599
  %vm601 = vweird.f32 %v595
  %vm602 = vweird.f32 %v596
  %vm603 = vmor %vm601, %vm602
  %v604 = vsel %vm603, %v596, %v600
  %v605 = vand.u32 2147483647, %v595
  %vm606 = vcmp.eq.f32.partialorder %v605, 8.507059e+37
  %v607 = vand.u32 %v595, 2147483648
  %v608 = vor.u32 1.1754944e-38, %v607
  %v609 = vsel %vm606, %v608, %v604
  %v610 = vmul.f32 1.0, %v609
  %v611 = vtanh.pop %v590
  %v612 = vmul.f32 %v610, %v555
  %614 = vrot.lane.b32.xlu0 %v611, 68
  %v615 = vpop.permute.xlu0 %614
  %v617 = vmul.f32 %v610, %v615
  %619 = vrot.lane.b32.xlu0 %v617, 20
  %v620 = vpop.permute.xlu0 %619
  %v622 = vadd.f32 %v612, %v620
  %v623 = vtanh.pop %v622
  %625 = vrot.lane.b32.xlu0 %v623, 20
  %v626 = vpop.permute.xlu0 %625
  %v628 = vmul.f32 %v610, %v626
  %630 = vrot.lane.b32.xlu0 %v628, 88
  %v631 = vpop.permute.xlu0 %630
  %s633 = scalar_lea.vmem %s2, 16
  %634 = vst.msk [vmem:[%s633] sm:$0x3] %vm97, %v631
  %635 = vst.msk [vmem:[#allocation2] sm:$0x3] %vm97, %v631
  %637 = vrot.lane.b32.xlu0 %v622, 108
  %v638 = vpop.permute.xlu0 %637
  %640 = vst.msk [vmem:[#allocation3] sm:$0x3] %vm97, %v638
  // Predicated region
  $region14: #{useraction_forward.1} parent=0 // pred_check
    _
  $region15: #{useraction_forward.1} parent=0 // pred_check_branch
    %642 = sbr.rel (0) target = $region17
  $region16: #{useraction_forward.1} parent=0 // pred_region
    _
  $region17: #{useraction_forward.1} parent=0 // pred_fallthru
    _
  // Predicated region
  $region18: #{useraction_forward.1} parent=0 // pred_check
    _
  $region19: #{useraction_forward.1} parent=0 // pred_check_branch
    %644 = sbr.rel (0) target = $region21
  $region20: #{useraction_forward.1} parent=0 // pred_region
    _
  $region21: #{useraction_forward.1} parent=0 // pred_fallthru
    _

</llo_original>
